<compile_context>
chip_gen: v7x
topology: tpu7x:2x2x1
jax: 0.10.0
libtpu: 0.0.40
codegen_flags: <defaults>
</compile_context>

<pallas_src>
import jax
import jax.numpy as jnp
from jax import lax
from jax.experimental import pallas as pl
from jax.experimental.pallas import tpu as pltpu


# ----------------------------------------------------------------------------
# Fused kernel (one grid step = one image):
#   im2col conv matmul (K=128) -> ReLU -> GAP (sublane reduce) -> linear head
#   -> per-element BCE-with-logits terms.
# ----------------------------------------------------------------------------
def fused_kernel(x_ref, wc_ref, wl_ref, b_ref, t_ref, logits_ref, loss_ref):
    hw = x_ref.shape[1]                     # rows of this image's im2col block
    n_chunks = wc_ref.shape[0]              # vis_dim chunks (static)
    nc_pad = wl_ref.shape[-1]               # padded num_classes (128)
    inv_hw = 1.0 / hw

    x2d = x_ref[0]                          # (HW, 128) bf16, lane-dense K

    def body(j, acc):
        # Conv as a single full-depth MXU dot per chunk, f32 accumulation.
        y = jnp.dot(x2d, wc_ref[j], preferred_element_type=jnp.float32)
        y = jnp.maximum(y, 0.0)                               # ReLU
        # Global average pool: sublane (XLU) reduce -- the MXU stays free.
        feat = jnp.sum(y, axis=0, keepdims=True) * inv_hw     # (1, c_chunk) f32
        # Linear head partial: accumulate logits over vis_dim chunks.
        return acc + jnp.dot(feat.astype(jnp.bfloat16), wl_ref[j],
                             preferred_element_type=jnp.float32)

    acc0 = jnp.zeros((1, nc_pad), dtype=jnp.float32)
    acc = lax.fori_loop(0, n_chunks, body, acc0, unroll=True)

    z = acc + b_ref[...]                                      # (1, 128) f32
    t = t_ref[0]                                              # (1, 128) f32
    # Numerically stable BCE-with-logits, per element (mean taken in wrapper).
    per = jnp.maximum(z, 0.0) - z * t + jnp.log1p(jnp.exp(-jnp.abs(z)))

    logits_ref[0] = z                                         # lane-dense store
    loss_ref[0] = per                                         # lane-dense store


def fused_forward(x_cols, w_conv_chunks, w_lin_chunks, b_pad, t_pad):
    B, HW, Kp = x_cols.shape
    n_chunks, _, c_chunk = w_conv_chunks.shape
    NCp = w_lin_chunks.shape[-1]

    logits_pad, loss_terms = pl.pallas_call(
        fused_kernel,
        out_shape=(
            jax.ShapeDtypeStruct((B, 1, NCp), jnp.float32),   # padded logits
            jax.ShapeDtypeStruct((B, 1, NCp), jnp.float32),   # per-elem BCE terms
        ),
        grid=(B,),
        in_specs=[
            pl.BlockSpec((1, HW, Kp), lambda b: (b, 0, 0)),            # im2col LHS
            pl.BlockSpec((n_chunks, Kp, c_chunk), lambda b: (0, 0, 0)),  # conv W
            pl.BlockSpec((n_chunks, c_chunk, NCp), lambda b: (0, 0, 0)),  # head W
            pl.BlockSpec((1, NCp), lambda b: (0, 0)),                  # head bias
            pl.BlockSpec((1, 1, NCp), lambda b: (b, 0, 0)),            # targets
        ],
        out_specs=(
            pl.BlockSpec((1, 1, NCp), lambda b: (b, 0, 0)),
            pl.BlockSpec((1, 1, NCp), lambda b: (b, 0, 0)),
        ),
        compiler_params=pltpu.CompilerParams(
            # Independent per-image work: lets v7x shard the grid across its
            # two TensorCores; final loss mean happens in the wrapper.
            dimension_semantics=("parallel",),
        ),
    )(x_cols, w_conv_chunks, w_lin_chunks, b_pad, t_pad)
    return logits_pad, loss_terms


# ----------------------------------------------------------------------------
# Model.forward equivalent (wrapper glue is layout plumbing + a tiny mean).
# ----------------------------------------------------------------------------
@jax.jit
def model_forward(batch_images_nchw, batch_targets, params):
    x = jnp.transpose(batch_images_nchw, (0, 2, 3, 1))        # NHWC, f32
    B, H, W, Cin = x.shape
    HW = H * W

    # --- im2col for a 3x3 / stride-1 / pad-1 conv --------------------------
    xp = jnp.pad(x, ((0, 0), (1, 1), (1, 1), (0, 0)))
    taps = [xp[:, dh:dh + H, dw:dw + W, :]                    # tap-major order
            for dh in range(3) for dw in range(3)]
    cols = jnp.concatenate(taps, axis=-1).reshape(B, HW, 9 * Cin)

    K = 9 * Cin
    K_pad = ((K + 127) // 128) * 128       # pad K only to the next 128 multiple
    cols = jnp.pad(cols, ((0, 0), (0, 0), (0, K_pad - K))).astype(jnp.bfloat16)

    # --- weights ------------------------------------------------------------
    w_conv = params["w_conv"]              # (3, 3, Cin, vis_dim), HWIO
    C = w_conv.shape[-1]
    NC = params["b_lin"].shape[0]
    NC_pad = ((NC + 127) // 128) * 128     # lane-dense head / output
    c_chunk = 128 if C % 128 == 0 else C   # in-kernel vis_dim chunk
    n_chunks = C // c_chunk

    w_flat = w_conv.reshape(9 * Cin, C)    # tap-major order matches im2col
    w_flat = jnp.pad(w_flat, ((0, K_pad - K), (0, 0)))
    w_conv_chunks = (w_flat.reshape(K_pad, n_chunks, c_chunk)
                     .transpose(1, 0, 2).astype(jnp.bfloat16))

    w_lin_t = params["w_lin_t"]            # (vis_dim, NC)
    w_lin_p = jnp.pad(w_lin_t, ((0, 0), (0, NC_pad - NC)))
    w_lin_chunks = w_lin_p.reshape(n_chunks, c_chunk, NC_pad).astype(jnp.bfloat16)

    b_pad = jnp.pad(params["b_lin"], (0, NC_pad - NC)).reshape(1, NC_pad)
    b_pad = b_pad.astype(jnp.float32)
    t_pad = jnp.pad(batch_targets.astype(jnp.float32),
                    ((0, 0), (0, NC_pad - NC))).reshape(B, 1, NC_pad)

    logits_pad, loss_terms = fused_forward(
        cols, w_conv_chunks, w_lin_chunks, b_pad, t_pad)

    logits = logits_pad[:, 0, :NC]                 # drop padded classes
    loss = jnp.mean(loss_terms[:, 0, :NC])         # BCE mean over B*NC elems
    return logits, loss


if __name__ == "__main__":
    # Small shapes consistent with the module's forward:
    B, Cin, H, W = 2, 4, 16, 16
    VIS_DIM = 256       # stands in for 2048; chunked in-kernel in 128s
    NUM_CLASSES = 8

    key = jax.random.PRNGKey(0)
    k_img, k_tgt, k_wc, k_wl, k_bl = jax.random.split(key, 5)

    batch_images = jax.random.normal(k_img, (B, Cin, H, W), dtype=jnp.float32)
    batch_targets = jax.random.bernoulli(
        k_tgt, 0.5, (B, NUM_CLASSES)).astype(jnp.float32)

    params = {
        # conv3x3 weight in HWIO layout (3, 3, Cin, vis_dim)
        "w_conv": 0.05 * jax.random.normal(
            k_wc, (3, 3, Cin, VIS_DIM), dtype=jnp.float32),
        # nn.Linear(vis_dim, num_classes): stored transposed (vis_dim, NC)
        "w_lin_t": 0.05 * jax.random.normal(
            k_wl, (VIS_DIM, NUM_CLASSES), dtype=jnp.float32),
        "b_lin": 0.01 * jax.random.normal(
            k_bl, (NUM_CLASSES,), dtype=jnp.float32),
    }

    logits, loss = model_forward(batch_images, batch_targets, params)
    jax.block_until_ready(loss)

    # Mirrors the PyTorch return: (['BCEw/logits'], [round(loss, 4)], loss)
    result = (["BCEw/logits"], [round(float(loss), 4)], loss)
    assert jnp.isfinite(loss)
    assert logits.shape == (B, NUM_CLASSES)
    print("KERNEL_OK")
</pallas_src>

<mosaic_0001>
module attributes {stable_mosaic.version = 11 : i64} {
  func.func @fused_kernel(%arg0: i32, %arg1: memref<1x256x128xbf16, #tpu.memory_space<vmem>>, %arg2: memref<2x128x128xbf16, #tpu.memory_space<vmem>>, %arg3: memref<2x128x128xbf16, #tpu.memory_space<vmem>>, %arg4: memref<1x128xf32, #tpu.memory_space<vmem>>, %arg5: memref<1x1x128xf32, #tpu.memory_space<vmem>>, %arg6: memref<1x1x128xf32, #tpu.memory_space<vmem>>, %arg7: memref<1x1x128xf32, #tpu.memory_space<vmem>>) attributes {dimension_semantics = [#tpu.dimension_semantics<parallel>], iteration_bounds = array<i64: 2>, scalar_prefetch = 0 : i64, scratch_operands = 0 : i64, tpu.core_type = #tpu.core_type<tc>, window_params = [{transform_indices = @transform_0, window_bounds = array<i64: 1, 256, 128>}, {pipeline_mode = #tpu.pipeline_mode<synchronous>, transform_indices = @transform_1, window_bounds = array<i64: 2, 128, 128>}, {pipeline_mode = #tpu.pipeline_mode<synchronous>, transform_indices = @transform_2, window_bounds = array<i64: 2, 128, 128>}, {pipeline_mode = #tpu.pipeline_mode<synchronous>, transform_indices = @transform_3, window_bounds = array<i64: 1, 128>}, {transform_indices = @transform_4, window_bounds = array<i64: 1, 1, 128>}, {transform_indices = @transform_5, window_bounds = array<i64: 1, 1, 128>}, {transform_indices = @transform_6, window_bounds = array<i64: 1, 1, 128>}]} {
    %c0 = arith.constant 0 : index
    %c0_0 = arith.constant 0 : index
    %c0_1 = arith.constant 0 : index
    %0 = vector.load %arg1[%c0, %c0_0, %c0_1] : memref<1x256x128xbf16, #tpu.memory_space<vmem>>, vector<1x256x128xbf16>
    %1 = vector.shape_cast %0 : vector<1x256x128xbf16> to vector<256x128xbf16>
    %cst = arith.constant 0.000000e+00 : f32
    %2 = vector.broadcast %cst : f32 to vector<1x128xf32>
    %c0_i32 = arith.constant 0 : i32
    %3 = arith.index_cast %c0_i32 : i32 to index
    %c0_2 = arith.constant 0 : index
    %c0_3 = arith.constant 0 : index
    %4 = vector.load %arg2[%3, %c0_2, %c0_3] : memref<2x128x128xbf16, #tpu.memory_space<vmem>>, vector<1x128x128xbf16>
    %5 = vector.shape_cast %4 : vector<1x128x128xbf16> to vector<128x128xbf16>
    %cst_4 = arith.constant dense<0.000000e+00> : vector<256x128xf32>
    %6 = tpu.matmul %1, %5, %cst_4 {dimension_numbers = #tpu.dot_dimension_numbers<[1], [0], [0], [1], [0, 0, 1, 1], [], []>} : vector<256x128xbf16>, vector<128x128xbf16>, vector<256x128xf32> -> vector<256x128xf32>
    %cst_5 = arith.constant 0.000000e+00 : f32
    %7 = vector.broadcast %cst_5 : f32 to vector<256x128xf32>
    %8 = arith.maximumf %6, %7 : vector<256x128xf32>
    %cst_6 = arith.constant dense<0.000000e+00> : vector<128xf32>
    %9 = vector.multi_reduction <add>, %8, %cst_6 [0] : vector<256x128xf32> to vector<128xf32>
    %10 = vector.shape_cast %9 : vector<128xf32> to vector<1x128xf32>
    %cst_7 = arith.constant 3.906250e-03 : f32
    %11 = vector.broadcast %cst_7 : f32 to vector<1x128xf32>
    %12 = arith.mulf %10, %11 : vector<1x128xf32>
    %13 = arith.truncf %12 : vector<1x128xf32> to vector<1x128xbf16>
    %14 = arith.index_cast %c0_i32 : i32 to index
    %c0_8 = arith.constant 0 : index
    %c0_9 = arith.constant 0 : index
    %15 = vector.load %arg3[%14, %c0_8, %c0_9] : memref<2x128x128xbf16, #tpu.memory_space<vmem>>, vector<1x128x128xbf16>
    %16 = vector.shape_cast %15 : vector<1x128x128xbf16> to vector<128x128xbf16>
    %cst_10 = arith.constant dense<0.000000e+00> : vector<1x128xf32>
    %17 = tpu.matmul %13, %16, %cst_10 {dimension_numbers = #tpu.dot_dimension_numbers<[1], [0], [0], [1], [0, 0, 1, 1], [], []>} : vector<1x128xbf16>, vector<128x128xbf16>, vector<1x128xf32> -> vector<1x128xf32>
    %18 = arith.addf %2, %17 : vector<1x128xf32>
    %c1_i32 = arith.constant 1 : i32
    %19 = arith.index_cast %c1_i32 : i32 to index
    %c0_11 = arith.constant 0 : index
    %c0_12 = arith.constant 0 : index
    %20 = vector.load %arg2[%19, %c0_11, %c0_12] : memref<2x128x128xbf16, #tpu.memory_space<vmem>>, vector<1x128x128xbf16>
    %21 = vector.shape_cast %20 : vector<1x128x128xbf16> to vector<128x128xbf16>
    %cst_13 = arith.constant dense<0.000000e+00> : vector<256x128xf32>
    %22 = tpu.matmul %1, %21, %cst_13 {dimension_numbers = #tpu.dot_dimension_numbers<[1], [0], [0], [1], [0, 0, 1, 1], [], []>} : vector<256x128xbf16>, vector<128x128xbf16>, vector<256x128xf32> -> vector<256x128xf32>
    %cst_14 = arith.constant 0.000000e+00 : f32
    %23 = vector.broadcast %cst_14 : f32 to vector<256x128xf32>
    %24 = arith.maximumf %22, %23 : vector<256x128xf32>
    %cst_15 = arith.constant dense<0.000000e+00> : vector<128xf32>
    %25 = vector.multi_reduction <add>, %24, %cst_15 [0] : vector<256x128xf32> to vector<128xf32>
    %26 = vector.shape_cast %25 : vector<128xf32> to vector<1x128xf32>
    %cst_16 = arith.constant 3.906250e-03 : f32
    %27 = vector.broadcast %cst_16 : f32 to vector<1x128xf32>
    %28 = arith.mulf %26, %27 : vector<1x128xf32>
    %29 = arith.truncf %28 : vector<1x128xf32> to vector<1x128xbf16>
    %30 = arith.index_cast %c1_i32 : i32 to index
    %c0_17 = arith.constant 0 : index
    %c0_18 = arith.constant 0 : index
    %31 = vector.load %arg3[%30, %c0_17, %c0_18] : memref<2x128x128xbf16, #tpu.memory_space<vmem>>, vector<1x128x128xbf16>
    %32 = vector.shape_cast %31 : vector<1x128x128xbf16> to vector<128x128xbf16>
    %cst_19 = arith.constant dense<0.000000e+00> : vector<1x128xf32>
    %33 = tpu.matmul %29, %32, %cst_19 {dimension_numbers = #tpu.dot_dimension_numbers<[1], [0], [0], [1], [0, 0, 1, 1], [], []>} : vector<1x128xbf16>, vector<128x128xbf16>, vector<1x128xf32> -> vector<1x128xf32>
    %34 = arith.addf %18, %33 : vector<1x128xf32>
    %c2_i32 = arith.constant 2 : i32
    %c0_20 = arith.constant 0 : index
    %c0_21 = arith.constant 0 : index
    %35 = vector.load %arg4[%c0_20, %c0_21] : memref<1x128xf32, #tpu.memory_space<vmem>>, vector<1x128xf32>
    %36 = arith.addf %34, %35 : vector<1x128xf32>
    %c0_22 = arith.constant 0 : index
    %c0_23 = arith.constant 0 : index
    %c0_24 = arith.constant 0 : index
    %37 = vector.load %arg5[%c0_22, %c0_23, %c0_24] : memref<1x1x128xf32, #tpu.memory_space<vmem>>, vector<1x1x128xf32>
    %38 = vector.shape_cast %37 : vector<1x1x128xf32> to vector<1x128xf32>
    %cst_25 = arith.constant 0.000000e+00 : f32
    %39 = vector.broadcast %cst_25 : f32 to vector<1x128xf32>
    %40 = arith.maximumf %36, %39 : vector<1x128xf32>
    %41 = arith.mulf %36, %38 : vector<1x128xf32>
    %42 = arith.subf %40, %41 : vector<1x128xf32>
    %43 = math.absf %36 : vector<1x128xf32>
    %cst_26 = arith.constant 0.000000e+00 : f32
    %44 = vector.broadcast %cst_26 : f32 to vector<1x128xf32>
    %45 = arith.subf %44, %43 : vector<1x128xf32>
    %46 = math.exp %45 : vector<1x128xf32>
    %47 = math.log1p %46 : vector<1x128xf32>
    %48 = arith.addf %42, %47 : vector<1x128xf32>
    %c0_27 = arith.constant 0 : index
    %c0_28 = arith.constant 0 : index
    %c0_29 = arith.constant 0 : index
    %49 = vector.load %arg6[%c0_27, %c0_28, %c0_29] : memref<1x1x128xf32, #tpu.memory_space<vmem>>, vector<1x1x128xf32>
    %50 = vector.shape_cast %49 : vector<1x1x128xf32> to vector<1x128xf32>
    %51 = vector.shape_cast %36 : vector<1x128xf32> to vector<1x1x128xf32>
    tpu.vector_store %arg6[%c0_27, %c0_28, %c0_29], %51 {strides = array<i32>} : memref<1x1x128xf32, #tpu.memory_space<vmem>>, vector<1x1x128xf32>,
    %c0_30 = arith.constant 0 : index
    %c0_31 = arith.constant 0 : index
    %c0_32 = arith.constant 0 : index
    %52 = vector.load %arg7[%c0_30, %c0_31, %c0_32] : memref<1x1x128xf32, #tpu.memory_space<vmem>>, vector<1x1x128xf32>
    %53 = vector.shape_cast %52 : vector<1x1x128xf32> to vector<1x128xf32>
    %54 = vector.shape_cast %48 : vector<1x128xf32> to vector<1x1x128xf32>
    tpu.vector_store %arg7[%c0_30, %c0_31, %c0_32], %54 {strides = array<i32>} : memref<1x1x128xf32, #tpu.memory_space<vmem>>, vector<1x1x128xf32>,
    return
  }
  func.func @transform_0(%arg0: i32) -> (i32, i32, i32) {
    %c0_i32 = arith.constant 0 : i32
    %c0_i32_0 = arith.constant 0 : i32
    %c0_i32_1 = arith.constant 0 : i32
    return %arg0, %c0_i32, %c0_i32_0 : i32, i32, i32
  }
  func.func @transform_1(%arg0: i32) -> (i32, i32, i32) {
    %c0_i32 = arith.constant 0 : i32
    %c0_i32_0 = arith.constant 0 : i32
    %c0_i32_1 = arith.constant 0 : i32
    %c0_i32_2 = arith.constant 0 : i32
    return %c0_i32, %c0_i32_0, %c0_i32_1 : i32, i32, i32
  }
  func.func @transform_2(%arg0: i32) -> (i32, i32, i32) {
    %c0_i32 = arith.constant 0 : i32
    %c0_i32_0 = arith.constant 0 : i32
    %c0_i32_1 = arith.constant 0 : i32
    %c0_i32_2 = arith.constant 0 : i32
    return %c0_i32, %c0_i32_0, %c0_i32_1 : i32, i32, i32
  }
  func.func @transform_3(%arg0: i32) -> (i32, i32) {
    %c0_i32 = arith.constant 0 : i32
    %c0_i32_0 = arith.constant 0 : i32
    %c0_i32_1 = arith.constant 0 : i32
    return %c0_i32, %c0_i32_0 : i32, i32
  }
  func.func @transform_4(%arg0: i32) -> (i32, i32, i32) {
    %c0_i32 = arith.constant 0 : i32
    %c0_i32_0 = arith.constant 0 : i32
    %c0_i32_1 = arith.constant 0 : i32
    return %arg0, %c0_i32, %c0_i32_0 : i32, i32, i32
  }
  func.func @transform_5(%arg0: i32) -> (i32, i32, i32) {
    %c0_i32 = arith.constant 0 : i32
    %c0_i32_0 = arith.constant 0 : i32
    %c0_i32_1 = arith.constant 0 : i32
    return %arg0, %c0_i32, %c0_i32_0 : i32, i32, i32
  }
  func.func @transform_6(%arg0: i32) -> (i32, i32, i32) {
    %c0_i32 = arith.constant 0 : i32
    %c0_i32_0 = arith.constant 0 : i32
    %c0_i32_1 = arith.constant 0 : i32
    return %arg0, %c0_i32, %c0_i32_0 : i32, i32, i32
  }
}

</mosaic_0001>

<llo_original>
// kernel: model_forward.1
$region0: #{model_forward.1}
  #allocation0 [shape = 'u32[]', space=smem, size = 0x4, offset = 0x4, fixed_abs, tag = 'smem constant byte address 0x4 - core index']
  #allocation1 [shape = 'u32[144,128]{1,0:T(1,128)}', space=vmem, size = 0x12000, scoped, tag = 'internal scratch']
  %s0 = inlined_call_operand.vmem [shape: bf16[2,256,128], index: 0, kind: input, shape index: {}]
  %s1 = inlined_call_operand.vmem [shape: bf16[2,128,128], index: 1, kind: input, shape index: {}]
  %s2 = inlined_call_operand.vmem [shape: bf16[2,128,128], index: 2, kind: input, shape index: {}]
  %s3 = inlined_call_operand.vmem [shape: f32[1,128], index: 3, kind: input, shape index: {}]
  %s4 = inlined_call_operand.vmem [shape: f32[2,1,128], index: 4, kind: input, shape index: {}]
  %s5 = inlined_call_operand.hbm [shape: f32[2,1,128], index: 5, kind: output, shape index: {0}]
  %s6 = inlined_call_operand.vmem [shape: f32[2,1,128], index: 6, kind: output, shape index: {1}]
  %7 = xla_tuple %s5, %s6
  %s8 = sld [smem:[#allocation0]]
  $region61: #{model_forward.1} parent=0
    _
  %s10 = ssub.s32 1, %s8
  %s11 = scalar_select 0, %s10, %s8
  $region1: #{model_forward.1} parent=0
    #allocation2 [shape = 'u8[1024]{0}', space=vmem, size = 0x400, scoped, tag = 'output window, operand 0']
    #allocation3 [shape = 's32[2]{0}', space=sflag, size = 0x8, scoped, tag = 'scoped memory for model_forward.1']
    %12 = vsyncpa [#allocation3], 0
    %s13 = scalar_lea.sflag [#allocation3], 1
    %14 = vsyncpa %s13, 0
    loop: start=0, step=1, limit=4
    $region2: #{model_forward.1} parent=1 // loop_pre_header
      _
    $region3: #{model_forward.1} parent=1 // loop_header
      %s16 = sphi 0, %s20
      %p17 = scmp.ge.s32.totalorder %s16, 4
      %s26 = sphi 0, %s28
      %s29 = sphi 0, %s26
      %s30 = sphi 0, %s29
      %s46 = sphi 0, %s30
      %s50 = sphi 0, %s50
      %s52 = sphi 0, %s50
      %s53 = sphi 0, %s52
      %s67 = sphi 0, %s53
      %s71 = sphi 0, %s71
      %s73 = sphi 0, %s71
      %s74 = sphi 0, %s73
      %s88 = sphi 0, %s74
      %s92 = sphi 0, %s92
      %s94 = sphi 0, %s92
      %s95 = sphi 0, %s94
      %s109 = sphi 0, %s95
      %s115 = sphi 0, %s117
      %s118 = sphi 0, %s115
      %s119 = sphi 0, %s118
      %s135 = sphi 0, %s119
      %s141 = sphi 0, %s143
      %s144 = sphi 0, %s141
      %s145 = sphi 0, %s144
      %s161 = sphi 0, %s145
      %s167 = sphi 0, %s169
      %s170 = sphi 0, %s167
      %s171 = sphi 0, %s170
      %s187 = sphi 0, %s171
    $region4: #{model_forward.1} parent=1 // loop_header_branch
      %19 = sbr.rel (%p17) target = $region8
    $region5: #{model_forward.1} parent=1 // loop_body
      %s21 = ssub.s32 %s16, 1
      %s22 = ssub.s32 %s16, 2
      %s23 = sadd.s32 %s16, 1
      %s24 = ssub.s32 %s16, %s23
      %p25 = scmp.eq.s32.totalorder %s24, 0
      %s27 = sadd.s32 %s26, 1
      %s28 = scalar_select %p25, %s26, %s27
      %p31 = pneg %p25
      %p32 = scmp.eq.s32.totalorder %s16, 1
      %p33 = por %p31, %p32
      %p34 = scmp.ne.s32.totalorder %s26, %s29
      %p35 = scmp.eq.s32.totalorder %s16, 0
      %p36 = por %p34, %p35
      %p37 = scmp.ne.s32.totalorder %s26, %s29
      %p38 = scmp.eq.s32.totalorder %s21, 1
      %p39 = por %p37, %p38
      %p40 = scmp.ne.s32.totalorder %s29, %s30
      %p41 = scmp.eq.s32.totalorder %s21, 0
      %p42 = por %p40, %p41
      %p43 = scmp.ne.s32.totalorder %s29, %s30
      %p44 = scmp.eq.s32.totalorder %s22, 1
      %p45 = por %p43, %p44
      %p47 = scmp.ne.s32.totalorder %s30, %s46
      %p48 = scmp.eq.s32.totalorder %s22, 0
      %p49 = por %p47, %p48
      %s51 = sadd.s32 %s50, 1
      %p54 = scmp.eq.s32.totalorder %s16, 1
      %p55 = scmp.ne.s32.totalorder %s50, %s52
      %p56 = scmp.eq.s32.totalorder %s16, 0
      %p57 = por %p55, %p56
      %p58 = scmp.ne.s32.totalorder %s50, %s52
      %p59 = scmp.eq.s32.totalorder %s21, 1
      %p60 = por %p58, %p59
      %p61 = scmp.ne.s32.totalorder %s52, %s53
      %p62 = scmp.eq.s32.totalorder %s21, 0
      %p63 = por %p61, %p62
      %p64 = scmp.ne.s32.totalorder %s52, %s53
      %p65 = scmp.eq.s32.totalorder %s22, 1
      %p66 = por %p64, %p65
      %p68 = scmp.ne.s32.totalorder %s53, %s67
      %p69 = scmp.eq.s32.totalorder %s22, 0
      %p70 = por %p68, %p69
      %s72 = sadd.s32 %s71, 1
      %p75 = scmp.eq.s32.totalorder %s16, 1
      %p76 = scmp.ne.s32.totalorder %s71, %s73
      %p77 = scmp.eq.s32.totalorder %s16, 0
      %p78 = por %p76, %p77
      %p79 = scmp.ne.s32.totalorder %s71, %s73
      %p80 = scmp.eq.s32.totalorder %s21, 1
      %p81 = por %p79, %p80
      %p82 = scmp.ne.s32.totalorder %s73, %s74
      %p83 = scmp.eq.s32.totalorder %s21, 0
      %p84 = por %p82, %p83
      %p85 = scmp.ne.s32.totalorder %s73, %s74
      %p86 = scmp.eq.s32.totalorder %s22, 1
      %p87 = por %p85, %p86
      %p89 = scmp.ne.s32.totalorder %s74, %s88
      %p90 = scmp.eq.s32.totalorder %s22, 0
      %p91 = por %p89, %p90
      %s93 = sadd.s32 %s92, 1
      %p96 = scmp.eq.s32.totalorder %s16, 1
      %p97 = scmp.ne.s32.totalorder %s92, %s94
      %p98 = scmp.eq.s32.totalorder %s16, 0
      %p99 = por %p97, %p98
      %p100 = scmp.ne.s32.totalorder %s92, %s94
      %p101 = scmp.eq.s32.totalorder %s21, 1
      %p102 = por %p100, %p101
      %p103 = scmp.ne.s32.totalorder %s94, %s95
      %p104 = scmp.eq.s32.totalorder %s21, 0
      %p105 = por %p103, %p104
      %p106 = scmp.ne.s32.totalorder %s94, %s95
      %p107 = scmp.eq.s32.totalorder %s22, 1
      %p108 = por %p106, %p107
      %p110 = scmp.ne.s32.totalorder %s95, %s109
      %p111 = scmp.eq.s32.totalorder %s22, 0
      %p112 = por %p110, %p111
      %s113 = ssub.s32 %s16, %s23
      %p114 = scmp.eq.s32.totalorder %s113, 0
      %s116 = sadd.s32 %s115, 1
      %s117 = scalar_select %p114, %s115, %s116
      %p120 = pneg %p114
      %p121 = scmp.eq.s32.totalorder %s16, 1
      %p122 = por %p120, %p121
      %p123 = scmp.ne.s32.totalorder %s115, %s118
      %p124 = scmp.eq.s32.totalorder %s16, 0
      %p125 = por %p123, %p124
      %p126 = scmp.ne.s32.totalorder %s115, %s118
      %p127 = scmp.eq.s32.totalorder %s21, 1
      %p128 = por %p126, %p127
      %p129 = scmp.ne.s32.totalorder %s118, %s119
      %p130 = scmp.eq.s32.totalorder %s21, 0
      %p131 = por %p129, %p130
      %p132 = scmp.ne.s32.totalorder %s118, %s119
      %p133 = scmp.eq.s32.totalorder %s22, 1
      %p134 = por %p132, %p133
      %p136 = scmp.ne.s32.totalorder %s119, %s135
      %p137 = scmp.eq.s32.totalorder %s22, 0
      %p138 = por %p136, %p137
      %s139 = ssub.s32 %s16, %s23
      %p140 = scmp.eq.s32.totalorder %s139, 0
      %s142 = sadd.s32 %s141, 1
      %s143 = scalar_select %p140, %s141, %s142
      %p146 = pneg %p140
      %p147 = scmp.eq.s32.totalorder %s16, 1
      %p148 = por %p146, %p147
      %p149 = scmp.ne.s32.totalorder %s141, %s144
      %p150 = scmp.eq.s32.totalorder %s16, 0
      %p151 = por %p149, %p150
      %p152 = scmp.ne.s32.totalorder %s141, %s144
      %p153 = scmp.eq.s32.totalorder %s21, 1
      %p154 = por %p152, %p153
      %p155 = scmp.ne.s32.totalorder %s144, %s145
      %p156 = scmp.eq.s32.totalorder %s21, 0
      %p157 = por %p155, %p156
      %p158 = scmp.ne.s32.totalorder %s144, %s145
      %p159 = scmp.eq.s32.totalorder %s22, 1
      %p160 = por %p158, %p159
      %p162 = scmp.ne.s32.totalorder %s145, %s161
      %p163 = scmp.eq.s32.totalorder %s22, 0
      %p164 = por %p162, %p163
      %s165 = ssub.s32 %s16, %s23
      %p166 = scmp.eq.s32.totalorder %s165, 0
      %s168 = sadd.s32 %s167, 1
      %s169 = scalar_select %p166, %s167, %s168
      %p172 = pneg %p166
      %p173 = scmp.eq.s32.totalorder %s16, 1
      %p174 = por %p172, %p173
      %p175 = scmp.ne.s32.totalorder %s167, %s170
      %p176 = scmp.eq.s32.totalorder %s16, 0
      %p177 = por %p175, %p176
      %p178 = scmp.ne.s32.totalorder %s167, %s170
      %p179 = scmp.eq.s32.totalorder %s21, 1
      %p180 = por %p178, %p179
      %p181 = scmp.ne.s32.totalorder %s170, %s171
      %p182 = scmp.eq.s32.totalorder %s21, 0
      %p183 = por %p181, %p182
      %p184 = scmp.ne.s32.totalorder %s170, %s171
      %p185 = scmp.eq.s32.totalorder %s22, 1
      %p186 = por %p184, %p185
      %p188 = scmp.ne.s32.totalorder %s171, %s187
      %p189 = scmp.eq.s32.totalorder %s22, 0
      %p190 = por %p188, %p189
      %p191 = scmp.le.s32.totalorder 1, %s16
      %p192 = scmp.lt.s32.totalorder %s16, 3
      %p193 = pnand %p191, %p192
      %p194 = pneg %p193
      // Predicated region
      $region9: #{model_forward.1} parent=5 // pred_check
        _
      $region10: #{model_forward.1} parent=5 // pred_check_branch
        %196 = sbr.rel (%p193) target = $region12
      $region11: #{model_forward.1} parent=5 // pred_region
        %s197 = ssub.s32 %s16, 1
        // Predicated region
        $region13: #{model_forward.1} parent=11 // pred_check
          %p198 = pneg %p63
        $region14: #{model_forward.1} parent=11 // pred_check_branch
          %200 = sbr.rel (%p198) target = $region16
        $region15: #{model_forward.1} parent=11 // pred_region
          _
        $region16: #{model_forward.1} parent=11 // pred_fallthru
          _
        // Predicated region
        $region17: #{model_forward.1} parent=11 // pred_check
          %p201 = pneg %p84
        $region18: #{model_forward.1} parent=11 // pred_check_branch
          %203 = sbr.rel (%p201) target = $region20
        $region19: #{model_forward.1} parent=11 // pred_region
          _
        $region20: #{model_forward.1} parent=11 // pred_fallthru
          _
        // Predicated region
        $region21: #{model_forward.1} parent=11 // pred_check
          %p204 = pneg %p105
        $region22: #{model_forward.1} parent=11 // pred_check_branch
          %206 = sbr.rel (%p204) target = $region24
        $region23: #{model_forward.1} parent=11 // pred_region
          _
        $region24: #{model_forward.1} parent=11 // pred_fallthru
          _
      $region12: #{model_forward.1} parent=5 // pred_fallthru
        _
      %p207 = scmp.lt.s32.totalorder %s16, 2
      // Predicated region
      $region25: #{model_forward.1} parent=5 // pred_check
        %p208 = pneg %p207
      $region26: #{model_forward.1} parent=5 // pred_check_branch
        %210 = sbr.rel (%p208) target = $region28
      $region27: #{model_forward.1} parent=5 // pred_region
        // Predicated region
        $region29: #{model_forward.1} parent=27 // pred_check
          %p211 = pneg %p36
        $region30: #{model_forward.1} parent=27 // pred_check_branch
          %213 = sbr.rel (%p211) target = $region32
        $region31: #{model_forward.1} parent=27 // pred_region
          %p214 = scmp.lt.s32.totalorder %s16, 1
          %s215 = scalar_select %p214, %s16, 1
          %s216 = smul.addr %s215, 32
          %s217 = smul.addr %s216, 4
          %s218 = scalar_lea.vmem %s0, %s217
        $region32: #{model_forward.1} parent=27 // pred_fallthru
          _
        // Predicated region
        $region33: #{model_forward.1} parent=27 // pred_check
          %p219 = pneg %p125
        $region34: #{model_forward.1} parent=27 // pred_check_branch
          %221 = sbr.rel (%p219) target = $region36
        $region35: #{model_forward.1} parent=27 // pred_region
          %p222 = scmp.lt.s32.totalorder %s16, 1
          %s223 = scalar_select %p222, %s16, 1
          %s224 = scalar_lea.vmem %s4, %s223
        $region36: #{model_forward.1} parent=27 // pred_fallthru
          _
      $region28: #{model_forward.1} parent=5 // pred_fallthru
        _
      %p225 = scmp.le.s32.totalorder 1, %s16
      %p226 = scmp.lt.s32.totalorder %s16, 3
      %p227 = pnand %p225, %p226
      %p228 = pneg %p227
      // Predicated region
      $region37: #{model_forward.1} parent=5 // pred_check
        _
      $region38: #{model_forward.1} parent=5 // pred_check_branch
        %230 = sbr.rel (%p227) target = $region40
      $region39: #{model_forward.1} parent=5 // pred_region
        %s231 = ssub.s32 %s16, 1
        %p232 = scmp.lt.s32.totalorder %s21, 1
        %s233 = scalar_select %p232, %s21, 1
        %s234 = smul.addr %s233, 32
        %s235 = smul.addr %s234, 4
        %s236 = scalar_lea.vmem %s0, %s235
        %p237 = pneg %p42
        %p238 = pneg %p39
        %p239 = pneg %p63
        %p240 = pneg %p60
        %p241 = pneg %p84
        %p242 = pneg %p81
        %p243 = pneg %p105
        %p244 = pneg %p102
        %p245 = scmp.lt.s32.totalorder %s21, 1
        %s246 = scalar_select %p245, %s21, 1
        %s247 = scalar_lea.vmem %s4, %s246
        %p248 = pneg %p131
        %p249 = pneg %p128
        %p250 = pneg %p157
        %p251 = pneg %p154
        %s252 = sand.u32 %s144, 1
        %s253 = scalar_lea.sflag [#allocation3], %s252
        %s254 = sand.u32 %s144, 1
        %s255 = scalar_lea.vmem [#allocation2], %s254
        %p256 = pneg %p183
        %p257 = pneg %p180
        %p258 = scmp.lt.s32.totalorder %s21, 1
        %s259 = scalar_select %p258, %s21, 1
        %s260 = scalar_lea.vmem %s6, %s259
        %p261 = scmp.lt.s32.totalorder %s21, 1
        %s262 = scalar_select %p261, %s21, 1
        %s263 = smul.addr %s262, 32
        %s264 = smul.addr %s263, 4
        %s265 = scalar_lea.vmem %s0, %s264
        %p266 = scmp.lt.s32.totalorder %s21, 1
        %s267 = scalar_select %p266, %s21, 1
        %s268 = scalar_lea.vmem %s4, %s267
        %p269 = scmp.lt.s32.totalorder %s21, 1
        %s270 = scalar_select %p269, %s21, 1
        %s271 = scalar_lea.vmem %s6, %s270
        %v273 = vld [vmem:[%s265] sm:$0xf]
        %v274 = vld [vmem:[%s265 + $0x4] sm:$0xf]
        %v275 = vld [vmem:[%s265 + $0x8] sm:$0xf]
        %v276 = vld [vmem:[%s265 + $0xc] sm:$0xf]
        %v277 = vld [vmem:[%s265 + $0x10] sm:$0xf]
        %v278 = vld [vmem:[%s265 + $0x14] sm:$0xf]
        %v279 = vld [vmem:[%s265 + $0x18] sm:$0xf]
        %v280 = vld [vmem:[%s265 + $0x1c] sm:$0xf]
        %v281 = vld [vmem:[%s265 + $0x20] sm:$0xf]
        %v282 = vld [vmem:[%s265 + $0x24] sm:$0xf]
        %v283 = vld [vmem:[%s265 + $0x28] sm:$0xf]
        %v284 = vld [vmem:[%s265 + $0x2c] sm:$0xf]
        %v285 = vld [vmem:[%s265 + $0x30] sm:$0xf]
        %v286 = vld [vmem:[%s265 + $0x34] sm:$0xf]
        %v287 = vld [vmem:[%s265 + $0x38] sm:$0xf]
        %v288 = vld [vmem:[%s265 + $0x3c] sm:$0xf]
        %v289 = vld [vmem:[%s265 + $0x40] sm:$0xf]
        %v290 = vld [vmem:[%s265 + $0x44] sm:$0xf]
        %v291 = vld [vmem:[%s265 + $0x48] sm:$0xf]
        %v292 = vld [vmem:[%s265 + $0x4c] sm:$0xf]
        %v293 = vld [vmem:[%s265 + $0x50] sm:$0xf]
        %v294 = vld [vmem:[%s265 + $0x54] sm:$0xf]
        %v295 = vld [vmem:[%s265 + $0x58] sm:$0xf]
        %v296 = vld [vmem:[%s265 + $0x5c] sm:$0xf]
        %v297 = vld [vmem:[%s265 + $0x60] sm:$0xf]
        %v298 = vld [vmem:[%s265 + $0x64] sm:$0xf]
        %v299 = vld [vmem:[%s265 + $0x68] sm:$0xf]
        %v300 = vld [vmem:[%s265 + $0x6c] sm:$0xf]
        %v301 = vld [vmem:[%s265 + $0x70] sm:$0xf]
        %v302 = vld [vmem:[%s265 + $0x74] sm:$0xf]
        %v303 = vld [vmem:[%s265 + $0x78] sm:$0xf]
        %v304 = vld [vmem:[%s265 + $0x7c] sm:$0xf]
        %v305 = vld [vmem:[%s1] sm:$0xf]
        %v306 = vld [vmem:[%s1 + $0x4] sm:$0xf]
        %v307 = vld [vmem:[%s1 + $0x8] sm:$0xf]
        %v308 = vld [vmem:[%s1 + $0xc] sm:$0xf]
        %v309 = vld [vmem:[%s1 + $0x10] sm:$0xf]
        %v310 = vld [vmem:[%s1 + $0x14] sm:$0xf]
        %v311 = vld [vmem:[%s1 + $0x18] sm:$0xf]
        %v312 = vld [vmem:[%s1 + $0x1c] sm:$0xf]
        %v313 = vld [vmem:[%s1 + $0x20] sm:$0xf]
        %v314 = vld [vmem:[%s1 + $0x24] sm:$0xf]
        %v315 = vld [vmem:[%s1 + $0x28] sm:$0xf]
        %v316 = vld [vmem:[%s1 + $0x2c] sm:$0xf]
        %v317 = vld [vmem:[%s1 + $0x30] sm:$0xf]
        %v318 = vld [vmem:[%s1 + $0x34] sm:$0xf]
        %v319 = vld [vmem:[%s1 + $0x38] sm:$0xf]
        %v320 = vld [vmem:[%s1 + $0x3c] sm:$0xf]
        %v353 = vunpack.c.l.b16 %v273
        %v354 = vunpack.c.l.b16 %v274
        %v355 = vunpack.c.l.b16 %v275
        %v356 = vunpack.c.l.b16 %v276
        %v357 = vunpack.c.l.b16 %v277
        %v358 = vunpack.c.l.b16 %v278
        %v359 = vunpack.c.l.b16 %v279
        %v360 = vunpack.c.l.b16 %v280
        %v361 = vunpack.c.l.b16 %v281
        %v362 = vunpack.c.l.b16 %v282
        %v363 = vunpack.c.l.b16 %v283
        %v364 = vunpack.c.l.b16 %v284
        %v365 = vunpack.c.l.b16 %v285
        %v366 = vunpack.c.l.b16 %v286
        %v367 = vunpack.c.l.b16 %v287
        %v368 = vunpack.c.l.b16 %v288
        %v369 = vunpack.c.l.b16 %v289
        %v370 = vunpack.c.l.b16 %v290
        %v371 = vunpack.c.l.b16 %v291
        %v372 = vunpack.c.l.b16 %v292
        %v373 = vunpack.c.l.b16 %v293
        %v374 = vunpack.c.l.b16 %v294
        %v375 = vunpack.c.l.b16 %v295
        %v376 = vunpack.c.l.b16 %v296
        %v377 = vunpack.c.l.b16 %v297
        %v378 = vunpack.c.l.b16 %v298
        %v379 = vunpack.c.l.b16 %v299
        %v380 = vunpack.c.l.b16 %v300
        %v381 = vunpack.c.l.b16 %v301
        %v382 = vunpack.c.l.b16 %v302
        %v383 = vunpack.c.l.b16 %v303
        %v384 = vunpack.c.l.b16 %v304
        %v385 = vpack.c.b16 %v354, %v353
        %v386 = vpack.c.b16 %v356, %v355
        %v387 = vpack.c.b16 %v358, %v357
        %v388 = vpack.c.b16 %v360, %v359
        %v389 = vpack.c.b16 %v362, %v361
        %v390 = vpack.c.b16 %v364, %v363
        %v391 = vpack.c.b16 %v366, %v365
        %v392 = vpack.c.b16 %v368, %v367
        %v393 = vpack.c.b16 %v370, %v369
        %v394 = vpack.c.b16 %v372, %v371
        %v395 = vpack.c.b16 %v374, %v373
        %v396 = vpack.c.b16 %v376, %v375
        %v397 = vpack.c.b16 %v378, %v377
        %v398 = vpack.c.b16 %v380, %v379
        %v399 = vpack.c.b16 %v382, %v381
        %v400 = vpack.c.b16 %v384, %v383
        %v433 = vunpack.c.l.b16 %v305
        %v434 = vunpack.c.l.b16 %v306
        %v435 = vunpack.c.l.b16 %v307
        %v436 = vunpack.c.l.b16 %v308
        %v437 = vunpack.c.l.b16 %v309
        %v438 = vunpack.c.l.b16 %v310
        %v439 = vunpack.c.l.b16 %v311
        %v440 = vunpack.c.l.b16 %v312
        %v441 = vunpack.c.l.b16 %v313
        %v442 = vunpack.c.l.b16 %v314
        %v443 = vunpack.c.l.b16 %v315
        %v444 = vunpack.c.l.b16 %v316
        %v445 = vunpack.c.l.b16 %v317
        %v446 = vunpack.c.l.b16 %v318
        %v447 = vunpack.c.l.b16 %v319
        %v448 = vunpack.c.l.b16 %v320
        %v449 = vpack.c.b16 %v434, %v433
        %v450 = vpack.c.b16 %v436, %v435
        %v451 = vpack.c.b16 %v438, %v437
        %v452 = vpack.c.b16 %v440, %v439
        %v453 = vpack.c.b16 %v442, %v441
        %v454 = vpack.c.b16 %v444, %v443
        %v455 = vpack.c.b16 %v446, %v445
        %v456 = vpack.c.b16 %v448, %v447
        %465 = vmatprep.subr.bf16.mxu0 0
        %466 = vmatpush1.bf16.msra.mxu0 %v449
        %467 = vmatprep.subr.bf16.mxu0 0
        %468 = vmatpush1.bf16.msra.mxu0 %v450
        %469 = vmatprep.subr.bf16.mxu0 0
        %470 = vmatpush1.bf16.msra.mxu0 %v451
        %471 = vmatprep.subr.bf16.mxu0 0
        %472 = vmatpush1.bf16.msra.mxu0 %v452
        %473 = vmatprep.subr.bf16.mxu0 0
        %474 = vmatpush1.bf16.msra.mxu0 %v453
        %475 = vmatprep.subr.bf16.mxu0 0
        %476 = vmatpush1.bf16.msra.mxu0 %v454
        %477 = vmatprep.subr.bf16.mxu0 0
        %478 = vmatpush1.bf16.msra.mxu0 %v455
        %479 = vmatprep.subr.bf16.mxu0 0
        %480 = vmatpush1.bf16.msra.mxu0 %v456
        %481 = vmatprep.subr.bf16.mxu0 0
        %482 = vmatpush1.bf16.msra.mxu0 0
        %483 = vmatprep.subr.bf16.mxu0 0
        %484 = vmatpush1.bf16.msra.mxu0 0
        %485 = vmatprep.subr.bf16.mxu0 0
        %486 = vmatpush1.bf16.msra.mxu0 0
        %487 = vmatprep.subr.bf16.mxu0 0
        %488 = vmatpush1.bf16.msra.mxu0 0
        %489 = vmatprep.subr.bf16.mxu0 0
        %490 = vmatpush1.bf16.msra.mxu0 0
        %491 = vmatprep.subr.bf16.mxu0 0
        %492 = vmatpush1.bf16.msra.mxu0 0
        %493 = vmatprep.subr.bf16.mxu0 0
        %494 = vmatpush1.bf16.msra.mxu0 0
        %495 = vmatprep.subr.bf16.mxu0 0
        %496 = vmatpush1.bf16.msra.mxu0 0
        %497 = vmatprep.mubr.bf16.mxu0 0
        %498 = vmatmul.mubr.bf16.gmra.mrb[0].mxu0 %v385
        %v499 = vpop.f32.mrb[0].mxu0
        %v500 = vadd.f32 0.0, %v499
        %v501 = vpop.f32.mrb[0].mxu0
        %v502 = vpop.f32.mrb[0].mxu0
        %v503 = vadd.f32 0.0, %v502
        %v504 = vpop.f32.mrb[0].mxu0
        %505 = vmatprep.mubr.bf16.mxu0 0
        %506 = vmatmul.mubr.bf16.gmra.mrb[0].mxu0 %v386
        %v507 = vpop.f32.mrb[0].mxu0
        %v508 = vadd.f32 0.0, %v507
        %v509 = vpop.f32.mrb[0].mxu0
        %v510 = vpop.f32.mrb[0].mxu0
        %v511 = vadd.f32 0.0, %v510
        %v512 = vpop.f32.mrb[0].mxu0
        %513 = vmatprep.mubr.bf16.mxu0 0
        %514 = vmatmul.mubr.bf16.gmra.mrb[0].mxu0 %v387
        %v515 = vpop.f32.mrb[0].mxu0
        %v516 = vadd.f32 0.0, %v515
        %v517 = vpop.f32.mrb[0].mxu0
        %v518 = vpop.f32.mrb[0].mxu0
        %v519 = vadd.f32 0.0, %v518
        %v520 = vpop.f32.mrb[0].mxu0
        %521 = vmatprep.mubr.bf16.mxu0 0
        %522 = vmatmul.mubr.bf16.gmra.mrb[0].mxu0 %v388
        %v523 = vpop.f32.mrb[0].mxu0
        %v524 = vadd.f32 0.0, %v523
        %v525 = vpop.f32.mrb[0].mxu0
        %v526 = vpop.f32.mrb[0].mxu0
        %v527 = vadd.f32 0.0, %v526
        %v528 = vpop.f32.mrb[0].mxu0
        %529 = vmatprep.mubr.bf16.mxu0 0
        %530 = vmatmul.mubr.bf16.gmra.mrb[0].mxu0 %v389
        %v531 = vpop.f32.mrb[0].mxu0
        %v532 = vadd.f32 0.0, %v531
        %v533 = vpop.f32.mrb[0].mxu0
        %v534 = vpop.f32.mrb[0].mxu0
        %v535 = vadd.f32 0.0, %v534
        %v536 = vpop.f32.mrb[0].mxu0
        %537 = vmatprep.mubr.bf16.mxu0 0
        %538 = vmatmul.mubr.bf16.gmra.mrb[0].mxu0 %v390
        %v539 = vpop.f32.mrb[0].mxu0
        %v540 = vadd.f32 0.0, %v539
        %v541 = vpop.f32.mrb[0].mxu0
        %v542 = vpop.f32.mrb[0].mxu0
        %v543 = vadd.f32 0.0, %v542
        %v544 = vpop.f32.mrb[0].mxu0
        %545 = vmatprep.mubr.bf16.mxu0 0
        %546 = vmatmul.mubr.bf16.gmra.mrb[0].mxu0 %v391
        %v547 = vpop.f32.mrb[0].mxu0
        %v548 = vadd.f32 0.0, %v547
        %v549 = vpop.f32.mrb[0].mxu0
        %v550 = vpop.f32.mrb[0].mxu0
        %v551 = vadd.f32 0.0, %v550
        %v552 = vpop.f32.mrb[0].mxu0
        %553 = vmatprep.mubr.bf16.mxu0 0
        %554 = vmatmul.mubr.bf16.gmra.mrb[0].mxu0 %v392
        %v555 = vpop.f32.mrb[0].mxu0
        %v556 = vadd.f32 0.0, %v555
        %v557 = vpop.f32.mrb[0].mxu0
        %v558 = vpop.f32.mrb[0].mxu0
        %v559 = vadd.f32 0.0, %v558
        %v560 = vpop.f32.mrb[0].mxu0
        %561 = vmatprep.mubr.bf16.mxu0 0
        %562 = vmatmul.mubr.bf16.gmra.mrb[0].mxu0 %v393
        %v563 = vpop.f32.mrb[0].mxu0
        %v564 = vadd.f32 0.0, %v563
        %v565 = vpop.f32.mrb[0].mxu0
        %v566 = vpop.f32.mrb[0].mxu0
        %v567 = vadd.f32 0.0, %v566
        %v568 = vpop.f32.mrb[0].mxu0
        %569 = vmatprep.mubr.bf16.mxu0 0
        %570 = vmatmul.mubr.bf16.gmra.mrb[0].mxu0 %v394
        %v571 = vpop.f32.mrb[0].mxu0
        %v572 = vadd.f32 0.0, %v571
        %v573 = vpop.f32.mrb[0].mxu0
        %v574 = vpop.f32.mrb[0].mxu0
        %v575 = vadd.f32 0.0, %v574
        %v576 = vpop.f32.mrb[0].mxu0
        %577 = vmatprep.mubr.bf16.mxu0 0
        %578 = vmatmul.mubr.bf16.gmra.mrb[0].mxu0 %v395
        %v579 = vpop.f32.mrb[0].mxu0
        %v580 = vadd.f32 0.0, %v579
        %v581 = vpop.f32.mrb[0].mxu0
        %v582 = vpop.f32.mrb[0].mxu0
        %v583 = vadd.f32 0.0, %v582
        %v584 = vpop.f32.mrb[0].mxu0
        %585 = vmatprep.mubr.bf16.mxu0 0
        %586 = vmatmul.mubr.bf16.gmra.mrb[0].mxu0 %v396
        %v587 = vpop.f32.mrb[0].mxu0
        %v588 = vadd.f32 0.0, %v587
        %v589 = vpop.f32.mrb[0].mxu0
        %v590 = vpop.f32.mrb[0].mxu0
        %v591 = vadd.f32 0.0, %v590
        %v592 = vpop.f32.mrb[0].mxu0
        %593 = vmatprep.mubr.bf16.mxu0 0
        %594 = vmatmul.mubr.bf16.gmra.mrb[0].mxu0 %v397
        %v595 = vpop.f32.mrb[0].mxu0
        %v596 = vadd.f32 0.0, %v595
        %v597 = vpop.f32.mrb[0].mxu0
        %v598 = vpop.f32.mrb[0].mxu0
        %v599 = vadd.f32 0.0, %v598
        %v600 = vpop.f32.mrb[0].mxu0
        %601 = vmatprep.mubr.bf16.mxu0 0
        %602 = vmatmul.mubr.bf16.gmra.mrb[0].mxu0 %v398
        %v603 = vpop.f32.mrb[0].mxu0
        %v604 = vadd.f32 0.0, %v603
        %v605 = vpop.f32.mrb[0].mxu0
        %v606 = vpop.f32.mrb[0].mxu0
        %v607 = vadd.f32 0.0, %v606
        %v608 = vpop.f32.mrb[0].mxu0
        %609 = vmatprep.mubr.bf16.mxu0 0
        %610 = vmatmul.mubr.bf16.gmra.mrb[0].mxu0 %v399
        %v611 = vpop.f32.mrb[0].mxu0
        %v612 = vadd.f32 0.0, %v611
        %v613 = vpop.f32.mrb[0].mxu0
        %v614 = vpop.f32.mrb[0].mxu0
        %v615 = vadd.f32 0.0, %v614
        %v616 = vpop.f32.mrb[0].mxu0
        %617 = vmatprep.mubr.bf16.mxu0 0
        %618 = vmatmul.mubr.bf16.gmra.mrb[0].mxu0 %v400
        %v619 = vpop.f32.mrb[0].mxu0
        %v620 = vadd.f32 0.0, %v619
        %v621 = vpop.f32.mrb[0].mxu0
        %v622 = vpop.f32.mrb[0].mxu0
        %v623 = vadd.f32 0.0, %v622
        %v624 = vpop.f32.mrb[0].mxu0
        %625 = vdwg.mxu0
        %v626 = vmax.f32 %v500, 0.0
        %v627 = vmax.f32 %v503, 0.0
        %v628 = vmax.f32 %v508, 0.0
        %v629 = vmax.f32 %v511, 0.0
        %v630 = vmax.f32 %v516, 0.0
        %v631 = vmax.f32 %v519, 0.0
        %v632 = vmax.f32 %v524, 0.0
        %v633 = vmax.f32 %v527, 0.0
        %v634 = vmax.f32 %v532, 0.0
        %v635 = vmax.f32 %v535, 0.0
        %v636 = vmax.f32 %v540, 0.0
        %v637 = vmax.f32 %v543, 0.0
        %v638 = vmax.f32 %v548, 0.0
        %v639 = vmax.f32 %v551, 0.0
        %v640 = vmax.f32 %v556, 0.0
        %v641 = vmax.f32 %v559, 0.0
        %v642 = vmax.f32 %v564, 0.0
        %v643 = vmax.f32 %v567, 0.0
        %v644 = vmax.f32 %v572, 0.0
        %v645 = vmax.f32 %v575, 0.0
        %v646 = vmax.f32 %v580, 0.0
        %v647 = vmax.f32 %v583, 0.0
        %v648 = vmax.f32 %v588, 0.0
        %v649 = vmax.f32 %v591, 0.0
        %v650 = vmax.f32 %v596, 0.0
        %v651 = vmax.f32 %v599, 0.0
        %v652 = vmax.f32 %v604, 0.0
        %v653 = vmax.f32 %v607, 0.0
        %v654 = vmax.f32 %v612, 0.0
        %v655 = vmax.f32 %v615, 0.0
        %v656 = vmax.f32 %v620, 0.0
        %v657 = vmax.f32 %v623, 0.0
        %v658 = vadd.f32 %v626, %v627
        %v659 = vadd.f32 %v658, %v628
        %v660 = vadd.f32 %v659, %v629
        %v661 = vadd.f32 %v660, %v630
        %v662 = vadd.f32 %v661, %v631
        %v663 = vadd.f32 %v662, %v632
        %v664 = vadd.f32 %v663, %v633
        %v665 = vadd.f32 %v664, %v634
        %v666 = vadd.f32 %v665, %v635
        %v667 = vadd.f32 %v666, %v636
        %v668 = vadd.f32 %v667, %v637
        %v669 = vadd.f32 %v668, %v638
        %v670 = vadd.f32 %v669, %v639
        %v671 = vadd.f32 %v670, %v640
        %v672 = vadd.f32 %v671, %v641
        %v673 = vadd.f32 %v672, %v642
        %v674 = vadd.f32 %v673, %v643
        %v675 = vadd.f32 %v674, %v644
        %v676 = vadd.f32 %v675, %v645
        %v677 = vadd.f32 %v676, %v646
        %v678 = vadd.f32 %v677, %v647
        %v679 = vadd.f32 %v678, %v648
        %v680 = vadd.f32 %v679, %v649
        %v681 = vadd.f32 %v680, %v650
        %v682 = vadd.f32 %v681, %v651
        %v683 = vadd.f32 %v682, %v652
        %v684 = vadd.f32 %v683, %v653
        %v685 = vadd.f32 %v684, %v654
        %v686 = vadd.f32 %v685, %v655
        %v687 = vadd.f32 %v686, %v656
        %v688 = vadd.f32 %v687, %v657
        %v689 = vrot.slane %v688, 4
        %v690 = vadd.f32 %v688, %v689
        %v691 = vrot.slane %v690, 2
        %v692 = vadd.f32 %v690, %v691
        %v693 = vrot.slane %v692, 1
        %v694 = vadd.f32 %v692, %v693
        %v695 = vmul.f32 %v694, 0.00390625
        %v696 = vpack.c.bf16 %v695, %v695
        %v697 = vld [vmem:[%s2] sm:$0xf]
        %v698 = vld [vmem:[%s2 + $0x4] sm:$0xf]
        %v699 = vld [vmem:[%s2 + $0x8] sm:$0xf]
        %v700 = vld [vmem:[%s2 + $0xc] sm:$0xf]
        %v701 = vld [vmem:[%s2 + $0x10] sm:$0xf]
        %v702 = vld [vmem:[%s2 + $0x14] sm:$0xf]
        %v703 = vld [vmem:[%s2 + $0x18] sm:$0xf]
        %v704 = vld [vmem:[%s2 + $0x1c] sm:$0xf]
        %v705 = vld [vmem:[%s2 + $0x20] sm:$0xf]
        %v706 = vld [vmem:[%s2 + $0x24] sm:$0xf]
        %v707 = vld [vmem:[%s2 + $0x28] sm:$0xf]
        %v708 = vld [vmem:[%s2 + $0x2c] sm:$0xf]
        %v709 = vld [vmem:[%s2 + $0x30] sm:$0xf]
        %v710 = vld [vmem:[%s2 + $0x34] sm:$0xf]
        %v711 = vld [vmem:[%s2 + $0x38] sm:$0xf]
        %v712 = vld [vmem:[%s2 + $0x3c] sm:$0xf]
        %s713 = scalar_lea.vmem %s1, 64
        %v714 = vld [vmem:[%s713] sm:$0xf]
        %v715 = vld [vmem:[%s713 + $0x4] sm:$0xf]
        %v716 = vld [vmem:[%s713 + $0x8] sm:$0xf]
        %v717 = vld [vmem:[%s713 + $0xc] sm:$0xf]
        %v718 = vld [vmem:[%s713 + $0x10] sm:$0xf]
        %v719 = vld [vmem:[%s713 + $0x14] sm:$0xf]
        %v720 = vld [vmem:[%s713 + $0x18] sm:$0xf]
        %v721 = vld [vmem:[%s713 + $0x1c] sm:$0xf]
        %v722 = vld [vmem:[%s713 + $0x20] sm:$0xf]
        %v723 = vld [vmem:[%s713 + $0x24] sm:$0xf]
        %v724 = vld [vmem:[%s713 + $0x28] sm:$0xf]
        %v725 = vld [vmem:[%s713 + $0x2c] sm:$0xf]
        %v726 = vld [vmem:[%s713 + $0x30] sm:$0xf]
        %v727 = vld [vmem:[%s713 + $0x34] sm:$0xf]
        %v728 = vld [vmem:[%s713 + $0x38] sm:$0xf]
        %v729 = vld [vmem:[%s713 + $0x3c] sm:$0xf]
        %v746 = vunpack.c.l.b16 %v714
        %v747 = vunpack.c.l.b16 %v715
        %v748 = vunpack.c.l.b16 %v716
        %v749 = vunpack.c.l.b16 %v717
        %v750 = vunpack.c.l.b16 %v718
        %v751 = vunpack.c.l.b16 %v719
        %v752 = vunpack.c.l.b16 %v720
        %v753 = vunpack.c.l.b16 %v721
        %v754 = vunpack.c.l.b16 %v722
        %v755 = vunpack.c.l.b16 %v723
        %v756 = vunpack.c.l.b16 %v724
        %v757 = vunpack.c.l.b16 %v725
        %v758 = vunpack.c.l.b16 %v726
        %v759 = vunpack.c.l.b16 %v727
        %v760 = vunpack.c.l.b16 %v728
        %v761 = vunpack.c.l.b16 %v729
        %v762 = vpack.c.b16 %v747, %v746
        %v763 = vpack.c.b16 %v749, %v748
        %v764 = vpack.c.b16 %v751, %v750
        %v765 = vpack.c.b16 %v753, %v752
        %v766 = vpack.c.b16 %v755, %v754
        %v767 = vpack.c.b16 %v757, %v756
        %v768 = vpack.c.b16 %v759, %v758
        %v769 = vpack.c.b16 %v761, %v760
        %778 = vmatprep.subr.bf16.mxu0 0
        %779 = vmatpush1.bf16.msra.mxu0 %v762
        %780 = vmatprep.subr.bf16.mxu0 0
        %781 = vmatpush1.bf16.msra.mxu0 %v763
        %782 = vmatprep.subr.bf16.mxu0 0
        %783 = vmatpush1.bf16.msra.mxu0 %v764
        %784 = vmatprep.subr.bf16.mxu0 0
        %785 = vmatpush1.bf16.msra.mxu0 %v765
        %786 = vmatprep.subr.bf16.mxu0 0
        %787 = vmatpush1.bf16.msra.mxu0 %v766
        %788 = vmatprep.subr.bf16.mxu0 0
        %789 = vmatpush1.bf16.msra.mxu0 %v767
        %790 = vmatprep.subr.bf16.mxu0 0
        %791 = vmatpush1.bf16.msra.mxu0 %v768
        %792 = vmatprep.subr.bf16.mxu0 0
        %793 = vmatpush1.bf16.msra.mxu0 %v769
        %794 = vmatprep.subr.bf16.mxu0 0
        %795 = vmatpush1.bf16.msra.mxu0 0
        %796 = vmatprep.subr.bf16.mxu0 0
        %797 = vmatpush1.bf16.msra.mxu0 0
        %798 = vmatprep.subr.bf16.mxu0 0
        %799 = vmatpush1.bf16.msra.mxu0 0
        %800 = vmatprep.subr.bf16.mxu0 0
        %801 = vmatpush1.bf16.msra.mxu0 0
        %802 = vmatprep.subr.bf16.mxu0 0
        %803 = vmatpush1.bf16.msra.mxu0 0
        %804 = vmatprep.subr.bf16.mxu0 0
        %805 = vmatpush1.bf16.msra.mxu0 0
        %806 = vmatprep.subr.bf16.mxu0 0
        %807 = vmatpush1.bf16.msra.mxu0 0
        %808 = vmatprep.subr.bf16.mxu0 0
        %809 = vmatpush1.bf16.msra.mxu0 0
        %810 = vmatprep.mubr.bf16.mxu0 0
        %811 = vmatmul.mubr.bf16.gmra.mrb[0].mxu0 %v385
        %v812 = vpop.f32.mrb[0].mxu0
        %v813 = vadd.f32 0.0, %v812
        %v814 = vpop.f32.mrb[0].mxu0
        %v815 = vpop.f32.mrb[0].mxu0
        %v816 = vadd.f32 0.0, %v815
        %v817 = vpop.f32.mrb[0].mxu0
        %818 = vmatprep.mubr.bf16.mxu0 0
        %819 = vmatmul.mubr.bf16.gmra.mrb[0].mxu0 %v386
        %v820 = vpop.f32.mrb[0].mxu0
        %v821 = vadd.f32 0.0, %v820
        %v822 = vpop.f32.mrb[0].mxu0
        %v823 = vpop.f32.mrb[0].mxu0
        %v824 = vadd.f32 0.0, %v823
        %v825 = vpop.f32.mrb[0].mxu0
        %826 = vmatprep.mubr.bf16.mxu0 0
        %827 = vmatmul.mubr.bf16.gmra.mrb[0].mxu0 %v387
        %v828 = vpop.f32.mrb[0].mxu0
        %v829 = vadd.f32 0.0, %v828
        %v830 = vpop.f32.mrb[0].mxu0
        %v831 = vpop.f32.mrb[0].mxu0
        %v832 = vadd.f32 0.0, %v831
        %v833 = vpop.f32.mrb[0].mxu0
        %834 = vmatprep.mubr.bf16.mxu0 0
        %835 = vmatmul.mubr.bf16.gmra.mrb[0].mxu0 %v388
        %v836 = vpop.f32.mrb[0].mxu0
        %v837 = vadd.f32 0.0, %v836
        %v838 = vpop.f32.mrb[0].mxu0
        %v839 = vpop.f32.mrb[0].mxu0
        %v840 = vadd.f32 0.0, %v839
        %v841 = vpop.f32.mrb[0].mxu0
        %842 = vmatprep.mubr.bf16.mxu0 0
        %843 = vmatmul.mubr.bf16.gmra.mrb[0].mxu0 %v389
        %v844 = vpop.f32.mrb[0].mxu0
        %v845 = vadd.f32 0.0, %v844
        %v846 = vpop.f32.mrb[0].mxu0
        %v847 = vpop.f32.mrb[0].mxu0
        %v848 = vadd.f32 0.0, %v847
        %v849 = vpop.f32.mrb[0].mxu0
        %850 = vmatprep.mubr.bf16.mxu0 0
        %851 = vmatmul.mubr.bf16.gmra.mrb[0].mxu0 %v390
        %v852 = vpop.f32.mrb[0].mxu0
        %v853 = vadd.f32 0.0, %v852
        %v854 = vpop.f32.mrb[0].mxu0
        %v855 = vpop.f32.mrb[0].mxu0
        %v856 = vadd.f32 0.0, %v855
        %v857 = vpop.f32.mrb[0].mxu0
        %858 = vmatprep.mubr.bf16.mxu0 0
        %859 = vmatmul.mubr.bf16.gmra.mrb[0].mxu0 %v391
        %v860 = vpop.f32.mrb[0].mxu0
        %v861 = vadd.f32 0.0, %v860
        %v862 = vpop.f32.mrb[0].mxu0
        %v863 = vpop.f32.mrb[0].mxu0
        %v864 = vadd.f32 0.0, %v863
        %v865 = vpop.f32.mrb[0].mxu0
        %866 = vmatprep.mubr.bf16.mxu0 0
        %867 = vmatmul.mubr.bf16.gmra.mrb[0].mxu0 %v392
        %v868 = vpop.f32.mrb[0].mxu0
        %v869 = vadd.f32 0.0, %v868
        %v870 = vpop.f32.mrb[0].mxu0
        %v871 = vpop.f32.mrb[0].mxu0
        %v872 = vadd.f32 0.0, %v871
        %v873 = vpop.f32.mrb[0].mxu0
        %874 = vmatprep.mubr.bf16.mxu0 0
        %875 = vmatmul.mubr.bf16.gmra.mrb[0].mxu0 %v393
        %v876 = vpop.f32.mrb[0].mxu0
        %v877 = vadd.f32 0.0, %v876
        %v878 = vpop.f32.mrb[0].mxu0
        %v879 = vpop.f32.mrb[0].mxu0
        %v880 = vadd.f32 0.0, %v879
        %v881 = vpop.f32.mrb[0].mxu0
        %882 = vmatprep.mubr.bf16.mxu0 0
        %883 = vmatmul.mubr.bf16.gmra.mrb[0].mxu0 %v394
        %v884 = vpop.f32.mrb[0].mxu0
        %v885 = vadd.f32 0.0, %v884
        %v886 = vpop.f32.mrb[0].mxu0
        %v887 = vpop.f32.mrb[0].mxu0
        %v888 = vadd.f32 0.0, %v887
        %v889 = vpop.f32.mrb[0].mxu0
        %890 = vmatprep.mubr.bf16.mxu0 0
        %891 = vmatmul.mubr.bf16.gmra.mrb[0].mxu0 %v395
        %v892 = vpop.f32.mrb[0].mxu0
        %v893 = vadd.f32 0.0, %v892
        %v894 = vpop.f32.mrb[0].mxu0
        %v895 = vpop.f32.mrb[0].mxu0
        %v896 = vadd.f32 0.0, %v895
        %v897 = vpop.f32.mrb[0].mxu0
        %898 = vmatprep.mubr.bf16.mxu0 0
        %899 = vmatmul.mubr.bf16.gmra.mrb[0].mxu0 %v396
        %v900 = vpop.f32.mrb[0].mxu0
        %v901 = vadd.f32 0.0, %v900
        %v902 = vpop.f32.mrb[0].mxu0
        %v903 = vpop.f32.mrb[0].mxu0
        %v904 = vadd.f32 0.0, %v903
        %v905 = vpop.f32.mrb[0].mxu0
        %906 = vmatprep.mubr.bf16.mxu0 0
        %907 = vmatmul.mubr.bf16.gmra.mrb[0].mxu0 %v397
        %v908 = vpop.f32.mrb[0].mxu0
        %v909 = vadd.f32 0.0, %v908
        %v910 = vpop.f32.mrb[0].mxu0
        %v911 = vpop.f32.mrb[0].mxu0
        %v912 = vadd.f32 0.0, %v911
        %v913 = vpop.f32.mrb[0].mxu0
        %914 = vmatprep.mubr.bf16.mxu0 0
        %915 = vmatmul.mubr.bf16.gmra.mrb[0].mxu0 %v398
        %v916 = vpop.f32.mrb[0].mxu0
        %v917 = vadd.f32 0.0, %v916
        %v918 = vpop.f32.mrb[0].mxu0
        %v919 = vpop.f32.mrb[0].mxu0
        %v920 = vadd.f32 0.0, %v919
        %v921 = vpop.f32.mrb[0].mxu0
        %922 = vmatprep.mubr.bf16.mxu0 0
        %923 = vmatmul.mubr.bf16.gmra.mrb[0].mxu0 %v399
        %v924 = vpop.f32.mrb[0].mxu0
        %v925 = vadd.f32 0.0, %v924
        %v926 = vpop.f32.mrb[0].mxu0
        %v927 = vpop.f32.mrb[0].mxu0
        %v928 = vadd.f32 0.0, %v927
        %v929 = vpop.f32.mrb[0].mxu0
        %930 = vmatprep.mubr.bf16.mxu0 0
        %931 = vmatmul.mubr.bf16.gmra.mrb[0].mxu0 %v400
        %v932 = vpop.f32.mrb[0].mxu0
        %v933 = vadd.f32 0.0, %v932
        %v934 = vpop.f32.mrb[0].mxu0
        %v935 = vpop.f32.mrb[0].mxu0
        %v936 = vadd.f32 0.0, %v935
        %v937 = vpop.f32.mrb[0].mxu0
        %938 = vdwg.mxu0
        %v939 = vmax.f32 %v813, 0.0
        %v940 = vmax.f32 %v816, 0.0
        %v941 = vmax.f32 %v821, 0.0
        %v942 = vmax.f32 %v824, 0.0
        %v943 = vmax.f32 %v829, 0.0
        %v944 = vmax.f32 %v832, 0.0
        %v945 = vmax.f32 %v837, 0.0
        %v946 = vmax.f32 %v840, 0.0
        %v947 = vmax.f32 %v845, 0.0
        %v948 = vmax.f32 %v848, 0.0
        %v949 = vmax.f32 %v853, 0.0
        %v950 = vmax.f32 %v856, 0.0
        %v951 = vmax.f32 %v861, 0.0
        %v952 = vmax.f32 %v864, 0.0
        %v953 = vmax.f32 %v869, 0.0
        %v954 = vmax.f32 %v872, 0.0
        %v955 = vmax.f32 %v877, 0.0
        %v956 = vmax.f32 %v880, 0.0
        %v957 = vmax.f32 %v885, 0.0
        %v958 = vmax.f32 %v888, 0.0
        %v959 = vmax.f32 %v893, 0.0
        %v960 = vmax.f32 %v896, 0.0
        %v961 = vmax.f32 %v901, 0.0
        %v962 = vmax.f32 %v904, 0.0
        %v963 = vmax.f32 %v909, 0.0
        %v964 = vmax.f32 %v912, 0.0
        %v965 = vmax.f32 %v917, 0.0
        %v966 = vmax.f32 %v920, 0.0
        %v967 = vmax.f32 %v925, 0.0
        %v968 = vmax.f32 %v928, 0.0
        %v969 = vmax.f32 %v933, 0.0
        %v970 = vmax.f32 %v936, 0.0
        %v971 = vadd.f32 %v939, %v940
        %v972 = vadd.f32 %v971, %v941
        %v973 = vadd.f32 %v972, %v942
        %v974 = vadd.f32 %v973, %v943
        %v975 = vadd.f32 %v974, %v944
        %v976 = vadd.f32 %v975, %v945
        %v977 = vadd.f32 %v976, %v946
        %v978 = vadd.f32 %v977, %v947
        %v979 = vadd.f32 %v978, %v948
        %v980 = vadd.f32 %v979, %v949
        %v981 = vadd.f32 %v980, %v950
        %v982 = vadd.f32 %v981, %v951
        %v983 = vadd.f32 %v982, %v952
        %v984 = vadd.f32 %v983, %v953
        %v985 = vadd.f32 %v984, %v954
        %v986 = vadd.f32 %v985, %v955
        %v987 = vadd.f32 %v986, %v956
        %v988 = vadd.f32 %v987, %v957
        %v989 = vadd.f32 %v988, %v958
        %v990 = vadd.f32 %v989, %v959
        %v991 = vadd.f32 %v990, %v960
        %v992 = vadd.f32 %v991, %v961
        %v993 = vadd.f32 %v992, %v962
        %v994 = vadd.f32 %v993, %v963
        %v995 = vadd.f32 %v994, %v964
        %v996 = vadd.f32 %v995, %v965
        %v997 = vadd.f32 %v996, %v966
        %v998 = vadd.f32 %v997, %v967
        %v999 = vadd.f32 %v998, %v968
        %v1000 = vadd.f32 %v999, %v969
        %v1001 = vadd.f32 %v1000, %v970
        %v1002 = vrot.slane %v1001, 4
        %v1003 = vadd.f32 %v1001, %v1002
        %v1004 = vrot.slane %v1003, 2
        %v1005 = vadd.f32 %v1003, %v1004
        %v1006 = vrot.slane %v1005, 1
        %v1007 = vadd.f32 %v1005, %v1006
        %v1008 = vmul.f32 %v1007, 0.00390625
        %v1009 = vpack.c.bf16 %v1008, %v1008
        %s1010 = scalar_lea.vmem %s2, 64
        %v1011 = vld [vmem:[%s1010] sm:$0xf]
        %v1012 = vld [vmem:[%s1010 + $0x4] sm:$0xf]
        %v1013 = vld [vmem:[%s1010 + $0x8] sm:$0xf]
        %v1014 = vld [vmem:[%s1010 + $0xc] sm:$0xf]
        %v1015 = vld [vmem:[%s1010 + $0x10] sm:$0xf]
        %v1016 = vld [vmem:[%s1010 + $0x14] sm:$0xf]
        %v1017 = vld [vmem:[%s1010 + $0x18] sm:$0xf]
        %v1018 = vld [vmem:[%s1010 + $0x1c] sm:$0xf]
        %v1019 = vld [vmem:[%s1010 + $0x20] sm:$0xf]
        %v1020 = vld [vmem:[%s1010 + $0x24] sm:$0xf]
        %v1021 = vld [vmem:[%s1010 + $0x28] sm:$0xf]
        %v1022 = vld [vmem:[%s1010 + $0x2c] sm:$0xf]
        %v1023 = vld [vmem:[%s1010 + $0x30] sm:$0xf]
        %v1024 = vld [vmem:[%s1010 + $0x34] sm:$0xf]
        %v1025 = vld [vmem:[%s1010 + $0x38] sm:$0xf]
        %v1026 = vld [vmem:[%s1010 + $0x3c] sm:$0xf]
        %v1043 = vunpack.c.l.b16 %v1011
        %v1044 = vunpack.c.l.b16 %v1012
        %v1045 = vunpack.c.l.b16 %v1013
        %v1046 = vunpack.c.l.b16 %v1014
        %v1047 = vunpack.c.l.b16 %v1015
        %v1048 = vunpack.c.l.b16 %v1016
        %v1049 = vunpack.c.l.b16 %v1017
        %v1050 = vunpack.c.l.b16 %v1018
        %v1051 = vunpack.c.l.b16 %v1019
        %v1052 = vunpack.c.l.b16 %v1020
        %v1053 = vunpack.c.l.b16 %v1021
        %v1054 = vunpack.c.l.b16 %v1022
        %v1055 = vunpack.c.l.b16 %v1023
        %v1056 = vunpack.c.l.b16 %v1024
        %v1057 = vunpack.c.l.b16 %v1025
        %v1058 = vunpack.c.l.b16 %v1026
        %v1059 = vpack.c.b16 %v1044, %v1043
        %v1060 = vpack.c.b16 %v1046, %v1045
        %v1061 = vpack.c.b16 %v1048, %v1047
        %v1062 = vpack.c.b16 %v1050, %v1049
        %v1063 = vpack.c.b16 %v1052, %v1051
        %v1064 = vpack.c.b16 %v1054, %v1053
        %v1065 = vpack.c.b16 %v1056, %v1055
        %v1066 = vpack.c.b16 %v1058, %v1057
        %1075 = vmatprep.subr.bf16.mxu0 0
        %1076 = vmatpush1.bf16.msra.mxu0 %v1059
        %1077 = vmatprep.subr.bf16.mxu0 0
        %1078 = vmatpush1.bf16.msra.mxu0 %v1060
        %1079 = vmatprep.subr.bf16.mxu0 0
        %1080 = vmatpush1.bf16.msra.mxu0 %v1061
        %1081 = vmatprep.subr.bf16.mxu0 0
        %1082 = vmatpush1.bf16.msra.mxu0 %v1062
        %1083 = vmatprep.subr.bf16.mxu0 0
        %1084 = vmatpush1.bf16.msra.mxu0 %v1063
        %1085 = vmatprep.subr.bf16.mxu0 0
        %1086 = vmatpush1.bf16.msra.mxu0 %v1064
        %1087 = vmatprep.subr.bf16.mxu0 0
        %1088 = vmatpush1.bf16.msra.mxu0 %v1065
        %1089 = vmatprep.subr.bf16.mxu0 0
        %1090 = vmatpush1.bf16.msra.mxu0 %v1066
        %1091 = vmatprep.subr.bf16.mxu0 0
        %1092 = vmatpush1.bf16.msra.mxu0 0
        %1093 = vmatprep.subr.bf16.mxu0 0
        %1094 = vmatpush1.bf16.msra.mxu0 0
        %1095 = vmatprep.subr.bf16.mxu0 0
        %1096 = vmatpush1.bf16.msra.mxu0 0
        %1097 = vmatprep.subr.bf16.mxu0 0
        %1098 = vmatpush1.bf16.msra.mxu0 0
        %1099 = vmatprep.subr.bf16.mxu0 0
        %1100 = vmatpush1.bf16.msra.mxu0 0
        %1101 = vmatprep.subr.bf16.mxu0 0
        %1102 = vmatpush1.bf16.msra.mxu0 0
        %1103 = vmatprep.subr.bf16.mxu0 0
        %1104 = vmatpush1.bf16.msra.mxu0 0
        %1105 = vmatprep.subr.bf16.mxu0 0
        %1106 = vmatpush1.bf16.msra.mxu0 0
        %1107 = vmatprep.mubr.bf16.mxu0 0
        %1108 = vmatmul.mubr.bf16.gmra.mrb[0].mxu0 %v1009
        %v1109 = vpop.f32.mrb[0].mxu0
        %v1110 = vadd.f32 0.0, %v1109
        %v1111 = vpop.f32.mrb[0].mxu0
        %v1112 = vpop.f32.mrb[0].mxu0
        %v1113 = vpop.f32.mrb[0].mxu0
        %1114 = vdwg.mxu0
        %v1131 = vunpack.c.l.b16 %v697
        %v1132 = vunpack.c.l.b16 %v698
        %v1133 = vunpack.c.l.b16 %v699
        %v1134 = vunpack.c.l.b16 %v700
        %v1135 = vunpack.c.l.b16 %v701
        %v1136 = vunpack.c.l.b16 %v702
        %v1137 = vunpack.c.l.b16 %v703
        %v1138 = vunpack.c.l.b16 %v704
        %v1139 = vunpack.c.l.b16 %v705
        %v1140 = vunpack.c.l.b16 %v706
        %v1141 = vunpack.c.l.b16 %v707
        %v1142 = vunpack.c.l.b16 %v708
        %v1143 = vunpack.c.l.b16 %v709
        %v1144 = vunpack.c.l.b16 %v710
        %v1145 = vunpack.c.l.b16 %v711
        %v1146 = vunpack.c.l.b16 %v712
        %v1147 = vpack.c.b16 %v1132, %v1131
        %v1148 = vpack.c.b16 %v1134, %v1133
        %v1149 = vpack.c.b16 %v1136, %v1135
        %v1150 = vpack.c.b16 %v1138, %v1137
        %v1151 = vpack.c.b16 %v1140, %v1139
        %v1152 = vpack.c.b16 %v1142, %v1141
        %v1153 = vpack.c.b16 %v1144, %v1143
        %v1154 = vpack.c.b16 %v1146, %v1145
        %1163 = vmatprep.subr.bf16.mxu0 0
        %1164 = vmatpush1.bf16.msra.mxu0 %v1147
        %1165 = vmatprep.subr.bf16.mxu0 0
        %1166 = vmatpush1.bf16.msra.mxu0 %v1148
        %1167 = vmatprep.subr.bf16.mxu0 0
        %1168 = vmatpush1.bf16.msra.mxu0 %v1149
        %1169 = vmatprep.subr.bf16.mxu0 0
        %1170 = vmatpush1.bf16.msra.mxu0 %v1150
        %1171 = vmatprep.subr.bf16.mxu0 0
        %1172 = vmatpush1.bf16.msra.mxu0 %v1151
        %1173 = vmatprep.subr.bf16.mxu0 0
        %1174 = vmatpush1.bf16.msra.mxu0 %v1152
        %1175 = vmatprep.subr.bf16.mxu0 0
        %1176 = vmatpush1.bf16.msra.mxu0 %v1153
        %1177 = vmatprep.subr.bf16.mxu0 0
        %1178 = vmatpush1.bf16.msra.mxu0 %v1154
        %1179 = vmatprep.subr.bf16.mxu0 0
        %1180 = vmatpush1.bf16.msra.mxu0 0
        %1181 = vmatprep.subr.bf16.mxu0 0
        %1182 = vmatpush1.bf16.msra.mxu0 0
        %1183 = vmatprep.subr.bf16.mxu0 0
        %1184 = vmatpush1.bf16.msra.mxu0 0
        %1185 = vmatprep.subr.bf16.mxu0 0
        %1186 = vmatpush1.bf16.msra.mxu0 0
        %1187 = vmatprep.subr.bf16.mxu0 0
        %1188 = vmatpush1.bf16.msra.mxu0 0
        %1189 = vmatprep.subr.bf16.mxu0 0
        %1190 = vmatpush1.bf16.msra.mxu0 0
        %1191 = vmatprep.subr.bf16.mxu0 0
        %1192 = vmatpush1.bf16.msra.mxu0 0
        %1193 = vmatprep.subr.bf16.mxu0 0
        %1194 = vmatpush1.bf16.msra.mxu0 0
        %1195 = vmatprep.mubr.bf16.mxu0 0
        %1196 = vmatmul.mubr.bf16.gmra.mrb[0].mxu0 %v696
        %v1197 = vpop.f32.mrb[0].mxu0
        %v1198 = vadd.f32 %v1110, %v1197
        %v1199 = vpop.f32.mrb[0].mxu0
        %v1200 = vpop.f32.mrb[0].mxu0
        %v1201 = vpop.f32.mrb[0].mxu0
        %1202 = vdwg.mxu0
        %v1203 = vld [vmem:[%s3] sm:$0x1]
        %v1204 = vadd.f32 %v1198, %v1203
        %v1205 = vld [vmem:[%s268] sm:$0x1]
        %v1206 = vmax.f32 %v1204, 0.0
        %v1207 = vmul.f32 %v1204, %v1205
        %v1208 = vsub.f32 %v1206, %v1207
        %v1209 = vand.u32 2147483647, %v1204
        %v1210 = vsub.f32 0.0, %v1209
        %v1211 = vmul.f32 %v1210, 1.442695
        %v1212 = vpow.pop %v1211
        %v1213 = vadd.f32 %v1212, 1.0
        %v1214 = vlog2.pop %v1213
        %v1215 = vmul.f32 %v1214, 0.6931472
        %v1216 = vmul.f32 -0.5, %v1212
        %v1217 = vadd.f32 %v1216, 1.0
        %v1218 = vmul.f32 %v1217, %v1212
        %v1219 = vand.u32 2147483647, %v1212
        %vm1220 = vcmp.lt.f32.partialorder %v1219, 0.0004427343
        %v1221 = vsel %vm1220, %v1218, %v1215
        %v1222 = vadd.f32 %v1208, %v1221
        %1223 = vst [vmem:[%s255] sm:$0x1] %v1204
        %1224 = vst [vmem:[%s271] sm:$0x1] %v1222
        %s1225 = sand.u32 %s144, 1
        %s1226 = scalar_lea.sflag [#allocation3], %s1225
        %s1227 = sand.u32 %s144, 1
        %s1228 = scalar_lea.vmem [#allocation2], %s1227
        %p1229 = scmp.lt.s32.totalorder %s21, 1
        %s1230 = scalar_select %p1229, %s21, 1
        %s1231 = scalar_lea.vmem %s6, %s1230
        // Predicated region
        $region41: #{model_forward.1} parent=39 // pred_check
          %p1232 = pneg %p154
        $region42: #{model_forward.1} parent=39 // pred_check_branch
          %1234 = sbr.rel (%p1232) target = $region44
        $region43: #{model_forward.1} parent=39 // pred_region
          %s1236 = ssub.s32 16, 16
          %1237 = vsyncadd %s1226, %s1236
          %s1238 = smul.addr %s21, 16
          %s1239 = scalar_lea.hbm %s5, %s1238
          %s1241 = sshll.u32 %s1228, 4
          %s1242 = int_to_ptr.vmem [resolvable:$true] %s1241
          %1244 = dma.vmem_to_hbm [thread:$0]  %s1242, 16, %s1239, %s1226
        $region44: #{model_forward.1} parent=39 // pred_fallthru
          _
        // Predicated region
        $region45: #{model_forward.1} parent=39 // pred_check
          %p1245 = pneg %p180
        $region46: #{model_forward.1} parent=39 // pred_check_branch
          %1247 = sbr.rel (%p1245) target = $region48
        $region47: #{model_forward.1} parent=39 // pred_region
          _
        $region48: #{model_forward.1} parent=39 // pred_fallthru
          _
      $region40: #{model_forward.1} parent=5 // pred_fallthru
        _
      %p1248 = scmp.le.s32.totalorder 2, %s16
      // Predicated region
      $region49: #{model_forward.1} parent=5 // pred_check
        %p1249 = pneg %p1248
      $region50: #{model_forward.1} parent=5 // pred_check_branch
        %1251 = sbr.rel (%p1249) target = $region52
      $region51: #{model_forward.1} parent=5 // pred_region
        %s1252 = ssub.s32 %s16, 2
        // Predicated region
        $region53: #{model_forward.1} parent=51 // pred_check
          %p1253 = pneg %p160
        $region54: #{model_forward.1} parent=51 // pred_check_branch
          %1255 = sbr.rel (%p1253) target = $region56
        $region55: #{model_forward.1} parent=51 // pred_region
          %s1256 = sand.u32 %s145, 1
          %s1257 = scalar_lea.sflag [#allocation3], %s1256
          %s1258 = sand.u32 %s145, 1
          %s1259 = scalar_lea.vmem [#allocation2], %s1258
          %1260 = dma.done %s1257, 16
        $region56: #{model_forward.1} parent=51 // pred_fallthru
          _
        // Predicated region
        $region57: #{model_forward.1} parent=51 // pred_check
          %p1261 = pneg %p186
        $region58: #{model_forward.1} parent=51 // pred_check_branch
          %1263 = sbr.rel (%p1261) target = $region60
        $region59: #{model_forward.1} parent=51 // pred_region
          %p1264 = scmp.lt.s32.totalorder %s22, 1
          %s1265 = scalar_select %p1264, %s22, 1
          %s1266 = scalar_lea.vmem %s6, %s1265
        $region60: #{model_forward.1} parent=51 // pred_fallthru
          _
      $region52: #{model_forward.1} parent=5 // pred_fallthru
        _
    $region6: #{model_forward.1} parent=1 // loop_footer
      %s20 = sadd.s32 1, %s16
    $region7: #{model_forward.1} parent=1 // loop_footer_branch
      %15 = sbr.rel target = $region3
    $region8: #{model_forward.1} parent=1 // loop_exit
      _
    %1267 = vsyncpa [#allocation3], 1
    %s1268 = scalar_lea.sflag [#allocation3], 1
    %1269 = vsyncpa %s1268, 1

</llo_original>
